<compile_context>
chip_gen: v5e
topology: v5e:2x2
jax: 0.10.0
libtpu: 0.0.40
codegen_flags: <defaults>
</compile_context>

<pallas_src>
import math
import functools

import jax
import jax.numpy as jnp
from jax import lax
from jax.experimental import pallas as pl
from jax.experimental.pallas import tpu as pltpu


# int32 two's-complement views of the usual hash constants.
_PHI  = -1640531535   # 0x9E3779B1
_MIX1 = -2048144789   # 0x85EBCA6B
_MIX2 = -1028477387   # 0xC2B2AE35


# ----------------------------------------------------------------------------
# Parameter / buffer setup (glue, plain JAX): deterministic sin/cos pe table.
# ----------------------------------------------------------------------------
def make_pe_table(max_len: int, d_model: int) -> jnp.ndarray:
    position = jnp.arange(0, max_len, dtype=jnp.float32)[:, None]          # (L, 1)
    div_term = jnp.exp(
        jnp.arange(0, d_model, 2, dtype=jnp.float32)
        * (-math.log(10000.0) / d_model)
    )                                                                       # (D/2,)
    pe = jnp.zeros((max_len, d_model), dtype=jnp.float32)
    pe = pe.at[:, 0::2].set(jnp.sin(position * div_term))
    pe = pe.at[:, 1::2].set(jnp.cos(position * div_term))
    return pe                                                               # (L, D)


# ----------------------------------------------------------------------------
# Kernels
# ----------------------------------------------------------------------------
def posenc_eval_kernel(x_ref, pe_ref, o_ref):
    # x_ref: (ts, tb, D)   pe_ref: (ts, D)   o_ref: (ts, tb, D)
    y = x_ref[...] + pe_ref[...][:, None, :]          # broadcast over batch tile
    o_ref[...] = y.astype(o_ref.dtype)


def _mix32(x):
    # murmur3-style 32-bit finalizer (int32 arithmetic wraps; logical shifts).
    x = x ^ lax.shift_right_logical(x, 16)
    x = x * jnp.int32(_MIX1)
    x = x ^ lax.shift_right_logical(x, 13)
    x = x * jnp.int32(_MIX2)
    x = x ^ lax.shift_right_logical(x, 16)
    return x


def posenc_dropout_kernel(seed_ref, x_ref, pe_ref, o_ref, *, p: float,
                          n_batch: int, d_model: int):
    # Inverted dropout (torch.nn.Dropout training-mode semantics) using a
    # stateless counter-based hash PRNG: mask depends only on (seed, global
    # element index) -> identical regardless of tiling / grid-step order.
    ts, tb, D = x_ref.shape
    y = x_ref[...] + pe_ref[...][:, None, :]

    s_idx = pl.program_id(0) * ts + lax.broadcasted_iota(jnp.int32, (ts, tb, D), 0)
    b_idx = pl.program_id(1) * tb + lax.broadcasted_iota(jnp.int32, (ts, tb, D), 1)
    d_idx = lax.broadcasted_iota(jnp.int32, (ts, tb, D), 2)
    flat = (s_idx * jnp.int32(n_batch) + b_idx) * jnp.int32(d_model) + d_idx

    seed = seed_ref[0]
    z = _mix32(flat ^ (seed * jnp.int32(_PHI)))
    z = _mix32(z + seed)
    u = z & jnp.int32(0x7FFFFFFF)                       # uniform in [0, 2^31)
    thr = jnp.int32(int(round(p * float(1 << 31))))     # raw-integer threshold
    keep = u >= thr

    scale = 1.0 / (1.0 - p)
    o_ref[...] = jnp.where(keep, y * scale, jnp.zeros_like(y)).astype(o_ref.dtype)


# ----------------------------------------------------------------------------
# Tile selection (VMEM-budgeted, respects (8,128)/full-dim block legality)
# ----------------------------------------------------------------------------
def _divisors(n):
    ds, i = set(), 1
    while i * i <= n:
        if n % i == 0:
            ds.add(i)
            ds.add(n // i)
        i += 1
    return ds


def _choose_tiles(S, B, D, itemsize, target_bytes):
    # batch tile: B itself or a multiple-of-8 divisor of B (sublane rule).
    valid_tb = sorted({B} | {d for d in _divisors(B) if d % 8 == 0}, reverse=True)
    tb = valid_tb[-1]
    for cand in valid_tb:
        if cand * D * itemsize <= target_bytes:
            tb = cand
            break
    # seq tile: S itself or a multiple-of-8 divisor of S (pe block sublane rule).
    valid_ts = sorted({S} | {d for d in _divisors(S) if d % 8 == 0}, reverse=True)
    ts = valid_ts[-1]
    for cand in valid_ts:
        if cand * tb * D * itemsize <= target_bytes:
            ts = cand
            break
    return ts, tb


# ----------------------------------------------------------------------------
# Wrapper
# ----------------------------------------------------------------------------
def positional_encoding(
    x: jnp.ndarray,          # (S, B, D)  -- sequence-first, like the PyTorch module
    pe_table: jnp.ndarray,   # (max_len, D)
    *,
    dropout_p: float = 0.1,
    training: bool = False,
    seed: int = 0,
    seq_tile: int | None = None,
    batch_tile: int | None = None,
    target_tile_bytes: int = 2 << 20,   # ~2 MiB x/out tiles -> pipelined grid
) -> jnp.ndarray:
    S, B, D = x.shape
    assert pe_table.shape[0] >= S and pe_table.shape[1] == D
    pe = pe_table[:S].astype(x.dtype)                  # (S, D) == pe[:x.size(0)]

    itemsize = jnp.dtype(x.dtype).itemsize
    ts_auto, tb_auto = _choose_tiles(S, B, D, itemsize, target_tile_bytes)
    ts = seq_tile if seq_tile is not None else ts_auto
    tb = batch_tile if batch_tile is not None else tb_auto
    assert S % ts == 0 and B % tb == 0, "tiles must divide (seq, batch)"
    assert ts == S or ts % 8 == 0, "seq tile must be S or a multiple of 8"
    assert tb == B or tb % 8 == 0, "batch tile must be B or a multiple of 8"

    grid = (S // ts, B // tb)
    x_spec = pl.BlockSpec((ts, tb, D), lambda i, j: (i, j, 0))
    pe_spec = pl.BlockSpec((ts, D), lambda i, j: (i, 0))
    out_spec = pl.BlockSpec((ts, tb, D), lambda i, j: (i, j, 0))
    out_shape = jax.ShapeDtypeStruct((S, B, D), x.dtype)

    # Explicit VMEM budget: double-buffered x + out + pe tiles, plus headroom.
    x_tile_bytes = ts * tb * D * itemsize
    pe_tile_bytes = ts * D * jnp.dtype(pe.dtype).itemsize
    vmem_limit = int(4 * x_tile_bytes + 2 * pe_tile_bytes + (4 << 20))
    vmem_limit = max(min(vmem_limit, 64 << 20), 8 << 20)

    cparams = pltpu.CompilerParams(
        dimension_semantics=("parallel", "parallel"),
        vmem_limit_bytes=vmem_limit,
    )

    if (not training) or dropout_p == 0.0:
        # Dropout is identity in eval mode.
        return pl.pallas_call(
            posenc_eval_kernel,
            out_shape=out_shape,
            grid=grid,
            in_specs=[x_spec, pe_spec],
            out_specs=out_spec,
            compiler_params=cparams,
        )(x, pe)

    assert 0.0 < dropout_p < 1.0
    seed_arr = jnp.array([seed], dtype=jnp.int32)
    seed_spec = pl.BlockSpec(memory_space=pltpu.MemorySpace.SMEM)
    kernel = functools.partial(
        posenc_dropout_kernel, p=float(dropout_p), n_batch=B, d_model=D
    )
    return pl.pallas_call(
        kernel,
        out_shape=out_shape,
        grid=grid,
        in_specs=[seed_spec, x_spec, pe_spec],
        out_specs=out_spec,
        compiler_params=cparams,
    )(seed_arr, x, pe)


# ----------------------------------------------------------------------------
# Demo / self-check
# ----------------------------------------------------------------------------
if __name__ == "__main__":
    # Shapes consistent with the module's forward: (seq, batch, d_model).
    SEQ, BATCH, D_MODEL, MAX_LEN = 8, 2, 32, 64
    DROPOUT_P = 0.1

    key = jax.random.PRNGKey(0)
    x = jax.random.normal(key, (SEQ, BATCH, D_MODEL), dtype=jnp.float32)
    pe_table = make_pe_table(MAX_LEN, D_MODEL)
    ref = x + pe_table[:SEQ][:, None, :]

    # Eval-mode forward (dropout = identity): check against plain-JAX reference.
    out_eval = jax.block_until_ready(
        positional_encoding(x, pe_table, dropout_p=DROPOUT_P, training=False)
    )
    assert out_eval.shape == (SEQ, BATCH, D_MODEL)
    assert jnp.allclose(out_eval, ref, atol=1e-6), "eval-mode mismatch"

    # Eval mode with an explicit multi-step 2-D grid to exercise tiling.
    SEQ2, BATCH2, D2 = 32, 16, 128
    x2 = jax.random.normal(jax.random.PRNGKey(1), (SEQ2, BATCH2, D2), dtype=jnp.float32)
    pe2 = make_pe_table(SEQ2, D2)
    out2 = jax.block_until_ready(
        positional_encoding(x2, pe2, dropout_p=DROPOUT_P, training=False,
                            seq_tile=8, batch_tile=8)
    )
    ref2 = x2 + pe2[:SEQ2][:, None, :]
    assert jnp.allclose(out2, ref2, atol=1e-6), "tiled eval-mode mismatch"

    # Training-mode forward (inverted dropout, in-kernel counter-based hash PRNG).
    out_train = jax.block_until_ready(
        positional_encoding(x, pe_table, dropout_p=DROPOUT_P, training=True, seed=1234)
    )
    assert out_train.shape == (SEQ, BATCH, D_MODEL)
    scaled_ref = ref / (1.0 - DROPOUT_P)
    dropped = jnp.isclose(out_train, 0.0, atol=1e-6)
    ok = jnp.logical_or(dropped, jnp.isclose(out_train, scaled_ref, atol=1e-5))
    assert bool(jnp.all(ok)), "training-mode dropout mask/scale mismatch"
    drop_frac = float(jnp.mean(dropped.astype(jnp.float32)))
    assert 0.0 < drop_frac < 0.4, f"implausible drop fraction {drop_frac}"

    print("KERNEL_OK")
</pallas_src>

<mosaic_0001>
module attributes {stable_mosaic.version = 11 : i64} {
  func.func @posenc_eval_kernel(%arg0: i32, %arg1: i32, %arg2: memref<8x2x32xf32, #tpu.memory_space<vmem>>, %arg3: memref<8x32xf32, #tpu.memory_space<vmem>>, %arg4: memref<8x2x32xf32, #tpu.memory_space<vmem>>) attributes {dimension_semantics = [#tpu.dimension_semantics<parallel>, #tpu.dimension_semantics<parallel>], iteration_bounds = array<i64: 1, 1>, scalar_prefetch = 0 : i64, scratch_operands = 0 : i64, tpu.core_type = #tpu.core_type<tc>, window_params = [{transform_indices = @transform_0, window_bounds = array<i64: 8, 2, 32>}, {transform_indices = @transform_1, window_bounds = array<i64: 8, 32>}, {transform_indices = @transform_2, window_bounds = array<i64: 8, 2, 32>}]} {
    %c0 = arith.constant 0 : index
    %c0_0 = arith.constant 0 : index
    %c0_1 = arith.constant 0 : index
    %0 = vector.load %arg2[%c0, %c0_0, %c0_1] : memref<8x2x32xf32, #tpu.memory_space<vmem>>, vector<8x2x32xf32>
    %c0_2 = arith.constant 0 : index
    %c0_3 = arith.constant 0 : index
    %1 = vector.load %arg3[%c0_2, %c0_3] : memref<8x32xf32, #tpu.memory_space<vmem>>, vector<8x32xf32>
    %2 = vector.shape_cast %1 : vector<8x32xf32> to vector<8x1x32xf32>
    %3 = vector.broadcast %2 : vector<8x1x32xf32> to vector<8x2x32xf32>
    %4 = arith.addf %0, %3 : vector<8x2x32xf32>
    %c0_4 = arith.constant 0 : index
    %c0_5 = arith.constant 0 : index
    %c0_6 = arith.constant 0 : index
    %5 = vector.load %arg4[%c0_4, %c0_5, %c0_6] : memref<8x2x32xf32, #tpu.memory_space<vmem>>, vector<8x2x32xf32>
    tpu.vector_store %arg4[%c0_4, %c0_5, %c0_6], %4 {strides = array<i32>} : memref<8x2x32xf32, #tpu.memory_space<vmem>>, vector<8x2x32xf32>,
    return
  }
  func.func @transform_0(%arg0: i32, %arg1: i32) -> (i32, i32, i32) {
    %c0_i32 = arith.constant 0 : i32
    %c0_i32_0 = arith.constant 0 : i32
    return %arg0, %arg1, %c0_i32 : i32, i32, i32
  }
  func.func @transform_1(%arg0: i32, %arg1: i32) -> (i32, i32) {
    %c0_i32 = arith.constant 0 : i32
    %c0_i32_0 = arith.constant 0 : i32
    return %arg0, %c0_i32 : i32, i32
  }
  func.func @transform_2(%arg0: i32, %arg1: i32) -> (i32, i32, i32) {
    %c0_i32 = arith.constant 0 : i32
    %c0_i32_0 = arith.constant 0 : i32
    return %arg0, %arg1, %c0_i32 : i32, i32, i32
  }
}

</mosaic_0001>

<llo_original>
// kernel: tpu_custom_call.1
$region0: #{tpu_custom_call.1}
  #allocation0 [shape = 'u32[]', space=smem, size = 0x4, offset = 0x4, fixed_abs, tag = 'smem constant byte address 0x4 - core index']
  #allocation1 [shape = 'u32[72,128]{1,0:T(1,128)}', space=vmem, size = 0x9000, scoped, tag = 'internal scratch']
  %s0 = inlined_call_operand.hbm [shape: f32[8,2,32], index: 0, kind: input, shape index: {}]
  %s1 = inlined_call_operand.hbm [shape: f32[8,32], index: 1, kind: input, shape index: {}]
  %s2 = inlined_call_operand.hbm [shape: f32[8,2,32], index: 2, kind: output, shape index: {}]
  %s3 = sld [smem:[#allocation0]]
  $region26: #{tpu_custom_call.1} parent=0
    _
  %s5 = ssub.s32 1, %s3
  %s6 = scalar_select 0, %s5, %s3
  $region1: #{tpu_custom_call.1} parent=0
    #allocation2 [shape = 'u8[8192]{0}', space=vmem, size = 0x2000, scoped, tag = 'input window, operand 0, single buffered']
    #allocation3 [shape = 's32[1]{0}', space=sflag, size = 0x4, scoped, tag = 'scoped memory for tpu_custom_call.1']
    #allocation4 [shape = 's32[1]{0}', space=sflag, size = 0x4, scoped, tag = 'scoped memory for tpu_custom_call.1']
    #allocation5 [shape = 'u8[4096]{0}', space=vmem, size = 0x1000, scoped, tag = 'input window, operand 1, single buffered']
    #allocation6 [shape = 's32[1]{0}', space=sflag, size = 0x4, scoped, tag = 'scoped memory for tpu_custom_call.1']
    #allocation7 [shape = 'u8[8192]{0}', space=vmem, size = 0x2000, scoped, tag = 'output window, operand 0, single buffered']
    %7 = vsyncpa [#allocation3], 0
    %8 = vsyncpa [#allocation6], 0
    %9 = vsyncpa [#allocation4], 0
    // Predicated region
    $region2: #{tpu_custom_call.1} parent=1 // pred_check
      _
    $region3: #{tpu_custom_call.1} parent=1 // pred_check_branch
      %11 = sbr.rel (0) target = $region5
    $region4: #{tpu_custom_call.1} parent=1 // pred_region
      %13 = vsyncadd [#allocation3], 0
      %s14 = sshll.u32 %s0, 4
      %s15 = int_to_ptr.hbm [resolvable:$true] %s14
      %s16 = sshll.u32 [#allocation2], 4
      %s17 = int_to_ptr.vmem [resolvable:$true] %s16
      %22 = dma.hbm_to_vmem [thread:$0]  %s15, 256, %s17, [#allocation3], 32, 32, 2
    $region5: #{tpu_custom_call.1} parent=1 // pred_fallthru
      _
    // Predicated region
    $region6: #{tpu_custom_call.1} parent=1 // pred_check
      _
    $region7: #{tpu_custom_call.1} parent=1 // pred_check_branch
      %24 = sbr.rel (0) target = $region9
    $region8: #{tpu_custom_call.1} parent=1 // pred_region
      %26 = vsyncadd [#allocation6], 0
      %s28 = sshll.u32 %s1, 4
      %s29 = int_to_ptr.hbm [resolvable:$true] %s28
      %s30 = sshll.u32 [#allocation5], 4
      %s31 = int_to_ptr.vmem [resolvable:$true] %s30
      %33 = dma.hbm_to_vmem [thread:$0]  %s29, 128, %s31, [#allocation6]
    $region9: #{tpu_custom_call.1} parent=1 // pred_fallthru
      _
    // Predicated region
    $region10: #{tpu_custom_call.1} parent=1 // pred_check
      _
    $region11: #{tpu_custom_call.1} parent=1 // pred_check_branch
      %35 = sbr.rel (0) target = $region13
    $region12: #{tpu_custom_call.1} parent=1 // pred_region
      %37 = dma.done [#allocation3], 256
    $region13: #{tpu_custom_call.1} parent=1 // pred_fallthru
      _
    // Predicated region
    $region14: #{tpu_custom_call.1} parent=1 // pred_check
      _
    $region15: #{tpu_custom_call.1} parent=1 // pred_check_branch
      %39 = sbr.rel (0) target = $region17
    $region16: #{tpu_custom_call.1} parent=1 // pred_region
      %41 = dma.done [#allocation6], 128
    $region17: #{tpu_custom_call.1} parent=1 // pred_fallthru
      _
    %v42 = vld [vmem:[#allocation2] sm:$0x3]
    %v43 = vld [vmem:[#allocation2 + $0x2] sm:$0x3]
    %v44 = vld [vmem:[#allocation2 + $0x4] sm:$0x3]
    %v45 = vld [vmem:[#allocation2 + $0x6] sm:$0x3]
    %v46 = vld [vmem:[#allocation2 + $0x8] sm:$0x3]
    %v47 = vld [vmem:[#allocation2 + $0xa] sm:$0x3]
    %v48 = vld [vmem:[#allocation2 + $0xc] sm:$0x3]
    %v49 = vld [vmem:[#allocation2 + $0xe] sm:$0x3]
    %v50 = vld [vmem:[#allocation5] sm:$0xff]
    %v52 = vrot.slane %v50, 1
    %v53 = vrot.slane %v50, 2
    %v54 = vrot.slane %v50, 3
    %v55 = vrot.slane %v50, 4
    %v56 = vrot.slane %v50, 5
    %v57 = vrot.slane %v50, 6
    %v58 = vrot.slane %v50, 7
    %v59 = vperm.slane %v50, 0
    %v60 = vperm.slane %v52, 0
    %v61 = vperm.slane %v53, 0
    %v62 = vperm.slane %v54, 0
    %v63 = vperm.slane %v55, 0
    %v64 = vperm.slane %v56, 0
    %v65 = vperm.slane %v57, 0
    %v66 = vperm.slane %v58, 0
    %v75 = vadd.f32 %v42, %v59
    %v76 = vadd.f32 %v43, %v60
    %v77 = vadd.f32 %v44, %v61
    %v78 = vadd.f32 %v45, %v62
    %v79 = vadd.f32 %v46, %v63
    %v80 = vadd.f32 %v47, %v64
    %v81 = vadd.f32 %v48, %v65
    %v82 = vadd.f32 %v49, %v66
    %vm83 = vcmask 254976
    %84 = vst.msk [vmem:[#allocation7] sm:$0x3] %vm83, %v75
    %85 = vst.msk [vmem:[#allocation7 + $0x2] sm:$0x3] %vm83, %v76
    %86 = vst.msk [vmem:[#allocation7 + $0x4] sm:$0x3] %vm83, %v77
    %87 = vst.msk [vmem:[#allocation7 + $0x6] sm:$0x3] %vm83, %v78
    %88 = vst.msk [vmem:[#allocation7 + $0x8] sm:$0x3] %vm83, %v79
    %89 = vst.msk [vmem:[#allocation7 + $0xa] sm:$0x3] %vm83, %v80
    %90 = vst.msk [vmem:[#allocation7 + $0xc] sm:$0x3] %vm83, %v81
    %91 = vst.msk [vmem:[#allocation7 + $0xe] sm:$0x3] %vm83, %v82
    // Predicated region
    $region18: #{tpu_custom_call.1} parent=1 // pred_check
      _
    $region19: #{tpu_custom_call.1} parent=1 // pred_check_branch
      %93 = sbr.rel (0) target = $region21
    $region20: #{tpu_custom_call.1} parent=1 // pred_region
      %95 = vsyncadd [#allocation4], 0
      %s96 = sshll.u32 [#allocation7], 4
      %s97 = int_to_ptr.vmem [resolvable:$true] %s96
      %s98 = sshll.u32 %s2, 4
      %s99 = int_to_ptr.hbm [resolvable:$true] %s98
      %104 = dma.vmem_to_hbm [thread:$0]  %s97, 256, %s99, [#allocation4], 32, 32, 2
    $region21: #{tpu_custom_call.1} parent=1 // pred_fallthru
      _
    // Predicated region
    $region22: #{tpu_custom_call.1} parent=1 // pred_check
      _
    $region23: #{tpu_custom_call.1} parent=1 // pred_check_branch
      %106 = sbr.rel (0) target = $region25
    $region24: #{tpu_custom_call.1} parent=1 // pred_region
      %108 = dma.done [#allocation4], 256
    $region25: #{tpu_custom_call.1} parent=1 // pred_fallthru
      _
    %109 = vsyncpa [#allocation3], 1
    %110 = vsyncpa [#allocation6], 1
    %111 = vsyncpa [#allocation4], 1

</llo_original>
